<compile_context>
chip_gen: v7x
topology: tpu7x:2x2x1
jax: 0.10.0
libtpu: 0.0.40
codegen_flags: <defaults>
</compile_context>

<pallas_src>
import jax
import jax.numpy as jnp
from jax.experimental import pallas as pl
from jax.experimental.pallas import tpu as pltpu


def _round_up(x, m):
    return ((x + m - 1) // m) * m


def _vmem_capacity_bytes():
    try:
        return int(pltpu.get_tpu_info().vmem_capacity_bytes)
    except Exception:
        return 64 << 20   # v7x per-TensorCore capacity: safe lower bound


def _choose_batch_tile(B, A, R, H, af_isz, pf_isz, r_out, a_out,
                       emit_weight, has_mask):
    """Largest sublane-aligned batch tile whose double-buffered blocks plus
    materialized f32 intermediates fit a generation-aware VMEM budget."""
    cap = _vmem_capacity_bytes()
    vmem_limit = max(32 << 20, min(int(cap * 0.75), 100 << 20))
    budget = int(cap * 0.40)
    budget -= 2 * (R * H + 2 * H) * 4            # resident Wh/bh/wa buffers
    per_row = 2 * R * 4                          # h          (f32, 2 buffers)
    per_row += 2 * A * R * af_isz                # att_feats
    per_row += 2 * A * H * pf_isz                # p_att_feats
    if has_mask:
        per_row += 2 * A * 4                     # att_masks
    per_row += 2 * r_out * 4                     # att_res output (lane-padded)
    if emit_weight:
        per_row += 2 * a_out * 4                 # weight output  (lane-padded)
    per_row += (A * H + A * R + 4 * A) * 4       # f32 elementwise intermediates
    tb = max(1, budget // max(per_row, 1))
    tb = min(tb, 512, B)
    if B > 8:
        # guarantee >=2 grid steps so both v7x TensorCores get work
        tb = min(tb, max(8, ((B // 2) // 8) * 8))
    if tb < B:
        tb = max(8, (tb // 8) * 8)               # sublane-aligned blocks
    return int(tb), int(vmem_limit)


def _make_attention_kernel(*, has_mask, emit_weight, guard_rows,
                           B, TB, A, R, H, a_out, r_out):
    """Fused h2att -> tanh -> alpha_net -> (masked) softmax -> weighted sum."""

    def kernel(*refs):
        it = iter(refs)
        h_ref = next(it)
        att_ref = next(it)
        p_att_ref = next(it)
        mask_ref = next(it) if has_mask else None
        wh_ref = next(it)
        bh_ref = next(it)
        wa_ref = next(it)
        ba_ref = next(it)
        out_ref = next(it)
        weight_ref = next(it) if emit_weight else None

        # h2att: (TB,R) @ (R,H) + (1,H)  -- one MXU matmul per batch tile.
        att_h = jnp.dot(h_ref[...], wh_ref[...],
                        preferred_element_type=jnp.float32) + bh_ref[...]

        # dot = tanh(p_att + att_h) in f32 (inputs may be bf16 in HBM).
        # TODO(synk): if EUP/VALU bind on v7x, chunk this over A-tiles so the
        # (TB,A,H) intermediate never round-trips VMEM, and/or compute in bf16.
        dot = jnp.tanh(p_att_ref[...].astype(jnp.float32) + att_h[:, None, :])

        # alpha_net: contract H with the weight row (lane reduce, XLU);
        # the scalar bias lives in SMEM.
        scores = jnp.sum(dot * wa_ref[...], axis=-1) + ba_ref[0]     # (TB, A)

        if guard_rows:
            # Rows past B in the last (partial) tile hold garbage VMEM; zero
            # their scores so exp/reciprocal stay finite (their outputs are
            # never written back to HBM anyway).
            row = (jax.lax.broadcasted_iota(jnp.int32, (TB, 1), 0)
                   + pl.program_id(0) * TB)
            scores = jnp.where(row < B, scores, 0.0)

        # Softmax over regions, mask fused into the exponentials
        # (exp*mask then renormalize == softmax -> mask -> renormalize).
        m = jnp.max(scores, axis=-1, keepdims=True)
        e = jnp.exp(scores - m)
        if has_mask:
            e = e * mask_ref[...]
        denom = jnp.sum(e, axis=-1, keepdims=True)
        w = e * pl.reciprocal(denom, approx=False)                   # (TB, A)

        # att_res[b] = sum_a w[b,a] * att_feats[b,a,:]  -- VPU multiply +
        # sublane reduce; no degenerate M=1 MXU matmuls / per-row MRF drains.
        res = jnp.sum(w[:, :, None] * att_ref[...].astype(jnp.float32),
                      axis=1)                                        # (TB, R)

        if r_out > R:   # lane-dense store: pad to a multiple of 128 lanes
            res = jnp.concatenate(
                [res, jnp.zeros((TB, r_out - R), jnp.float32)], axis=-1)
        out_ref[...] = res.astype(out_ref.dtype)

        if emit_weight:
            w_store = w
            if a_out > A:
                w_store = jnp.concatenate(
                    [w, jnp.zeros((TB, a_out - A), jnp.float32)], axis=-1)
            weight_ref[...] = w_store.astype(weight_ref.dtype)

    return kernel


def attention_pallas(h, att_feats, p_att_feats, wh, bh, wa, ba,
                     att_masks=None, return_att=False):
    """Fused Attention.forward.  Returns att_res, or (att_res, weight)."""
    h = jnp.asarray(h, jnp.float32)
    att_feats = jnp.asarray(att_feats)
    p_att_feats = jnp.asarray(p_att_feats)
    # Keep the two dominant HBM streams in their incoming dtype: casting bf16
    # back to f32 here would double the traffic of this memory-bound kernel.
    if att_feats.dtype != jnp.bfloat16:
        att_feats = att_feats.astype(jnp.float32)
    if p_att_feats.dtype != jnp.bfloat16:
        p_att_feats = p_att_feats.astype(jnp.float32)

    B, R = h.shape
    att_feats = att_feats.reshape(B, -1, att_feats.shape[-1])
    A = att_feats.shape[1]
    p_att_feats = p_att_feats.reshape(B, A, -1)
    H = p_att_feats.shape[-1]

    has_mask = att_masks is not None
    emit_weight = bool(return_att)
    r_out = _round_up(R, 128)
    a_out = _round_up(A, 128)

    tb, vmem_limit = _choose_batch_tile(
        B, A, R, H, att_feats.dtype.itemsize, p_att_feats.dtype.itemsize,
        r_out, a_out, emit_weight, has_mask)
    grid = (pl.cdiv(B, tb),)
    guard_rows = (B % tb) != 0

    wh2 = jnp.asarray(wh, jnp.float32).reshape(R, H)
    bh2 = jnp.asarray(bh, jnp.float32).reshape(1, H)
    wa2 = jnp.asarray(wa, jnp.float32).reshape(1, H)      # alpha_net weight row
    ba1 = jnp.asarray(ba, jnp.float32).reshape(-1)[:1]    # scalar bias -> SMEM

    in_specs = [
        pl.BlockSpec((tb, R), lambda b: (b, 0)),           # h
        pl.BlockSpec((tb, A, R), lambda b: (b, 0, 0)),     # att_feats
        pl.BlockSpec((tb, A, H), lambda b: (b, 0, 0)),     # p_att_feats
    ]
    inputs = [h, att_feats, p_att_feats]
    if has_mask:
        mask = jnp.asarray(att_masks, jnp.float32).reshape(B, A)
        in_specs.append(pl.BlockSpec((tb, A), lambda b: (b, 0)))
        inputs.append(mask)
    in_specs += [
        pl.BlockSpec((R, H), lambda b: (0, 0)),            # Wh (resident)
        pl.BlockSpec((1, H), lambda b: (0, 0)),            # bh
        pl.BlockSpec((1, H), lambda b: (0, 0)),            # wa
        pl.BlockSpec(memory_space=pltpu.MemorySpace.SMEM),  # ba (scalar)
    ]
    inputs += [wh2, bh2, wa2, ba1]

    res_spec = pl.BlockSpec((tb, r_out), lambda b: (b, 0))
    res_shape = jax.ShapeDtypeStruct((B, r_out), jnp.float32)
    if emit_weight:
        out_specs = [res_spec, pl.BlockSpec((tb, a_out), lambda b: (b, 0))]
        out_shape = (res_shape, jax.ShapeDtypeStruct((B, a_out), jnp.float32))
    else:
        out_specs = res_spec
        out_shape = res_shape

    kernel = _make_attention_kernel(
        has_mask=has_mask, emit_weight=emit_weight, guard_rows=guard_rows,
        B=B, TB=tb, A=A, R=R, H=H, a_out=a_out, r_out=r_out)

    grid_spec = pltpu.PrefetchScalarGridSpec(
        num_scalar_prefetch=0, grid=grid,
        in_specs=in_specs, out_specs=out_specs)

    out = pl.pallas_call(
        kernel,
        out_shape=out_shape,
        grid_spec=grid_spec,
        compiler_params=pltpu.CompilerParams(
            dimension_semantics=("parallel",),
            vmem_limit_bytes=vmem_limit),
    )(*inputs)

    if emit_weight:
        att_res_p, weight_p = out
        att_res = att_res_p[:, :R] if r_out != R else att_res_p
        weight = weight_p[:, :A] if a_out != A else weight_p
        return att_res, weight
    att_res_p = out
    return att_res_p[:, :R] if r_out != R else att_res_p


def attention_ref(h, att_feats, p_att_feats, wh, bh, wa, ba, att_masks=None):
    """Plain-JAX reference mirroring the PyTorch forward (f32 compute)."""
    h = h.astype(jnp.float32)
    att_feats = att_feats.astype(jnp.float32)
    p_att_feats = p_att_feats.astype(jnp.float32)
    B, A, H = p_att_feats.shape
    att_h = h @ wh + bh                                 # (B, H)
    dot = jnp.tanh(p_att_feats + att_h[:, None, :])     # (B, A, H)
    scores = (dot @ wa.reshape(H, 1))[..., 0] + ba.reshape(())   # (B, A)
    weight = jax.nn.softmax(scores, axis=1)
    if att_masks is not None:
        weight = weight * att_masks.astype(jnp.float32)
        weight = weight / jnp.sum(weight, axis=1, keepdims=True)
    att_res = jnp.einsum("ba,bar->br", weight, att_feats)
    return att_res, weight


if __name__ == "__main__":
    # opt.rnn_size = 32, opt.att_hid_size = 32
    R, H = 32, 32
    key = jax.random.PRNGKey(0)
    k_h, k_af, k_paf, k_wh, k_bh, k_wa, k_ba, k_m = jax.random.split(key, 8)

    # Linear params (stored transposed: y = x @ W^T + b)
    wh = 0.1 * jax.random.normal(k_wh, (R, H), dtype=jnp.float32)  # h2att.weight^T
    bh = 0.1 * jax.random.normal(k_bh, (H,), dtype=jnp.float32)    # h2att.bias
    wa = 0.1 * jax.random.normal(k_wa, (H,), dtype=jnp.float32)    # alpha_net.weight
    ba = 0.1 * jax.random.normal(k_ba, (1,), dtype=jnp.float32)    # alpha_net.bias

    # --- test 1: f32 inputs, masked, return_att=True (B=2, A=8) -------------
    B, A = 2, 8
    h = jax.random.normal(k_h, (B, R), dtype=jnp.float32)
    att_feats = jax.random.normal(k_af, (B, A, R), dtype=jnp.float32)
    p_att_feats = jax.random.normal(k_paf, (B, A, H), dtype=jnp.float32)
    att_masks = (jax.random.uniform(k_m, (B, A)) > 0.2).astype(jnp.float32)
    att_masks = att_masks.at[:, 0].set(1.0)   # no all-zero mask row

    att_res, weight = attention_pallas(h, att_feats, p_att_feats,
                                       wh, bh, wa, ba, att_masks,
                                       return_att=True)
    jax.block_until_ready(att_res)
    jax.block_until_ready(weight)
    ref_res, ref_w = attention_ref(h, att_feats, p_att_feats,
                                   wh, bh, wa, ba, att_masks)
    assert att_res.shape == (B, R) and weight.shape == (B, A)
    assert jnp.allclose(att_res, ref_res, atol=1e-5, rtol=1e-5)
    assert jnp.allclose(weight, ref_w, atol=1e-5, rtol=1e-5)

    # --- test 2: f32 inputs, no mask, att_res only (matches default forward) -
    att_res_nm = attention_pallas(h, att_feats, p_att_feats, wh, bh, wa, ba)
    jax.block_until_ready(att_res_nm)
    ref_res_nm, _ = attention_ref(h, att_feats, p_att_feats, wh, bh, wa, ba)
    assert att_res_nm.shape == (B, R)
    assert jnp.allclose(att_res_nm, ref_res_nm, atol=1e-5, rtol=1e-5)

    # --- test 3: bf16 feature streams (cast upstream), multi-tile grid ------
    B2, A2 = 10, 8
    kb = jax.random.split(jax.random.PRNGKey(1), 4)
    h2 = jax.random.normal(kb[0], (B2, R), dtype=jnp.float32)
    af2 = jax.random.normal(kb[1], (B2, A2, R),
                            dtype=jnp.float32).astype(jnp.bfloat16)
    paf2 = jax.random.normal(kb[2], (B2, A2, H),
                             dtype=jnp.float32).astype(jnp.bfloat16)
    m2 = (jax.random.uniform(kb[3], (B2, A2)) > 0.2).astype(jnp.float32)
    m2 = m2.at[:, 0].set(1.0)

    res2, w2 = attention_pallas(h2, af2, paf2, wh, bh, wa, ba, m2,
                                return_att=True)
    jax.block_until_ready(res2)
    jax.block_until_ready(w2)
    # Reference on the same bf16-quantized values (f32 compute in both paths);
    # tolerance relaxed per the bf16-input plan.
    ref2, refw2 = attention_ref(h2, af2.astype(jnp.float32),
                                paf2.astype(jnp.float32), wh, bh, wa, ba, m2)
    assert res2.shape == (B2, R) and w2.shape == (B2, A2)
    assert jnp.allclose(res2, ref2, atol=1e-3, rtol=1e-3)
    assert jnp.allclose(w2, refw2, atol=1e-3, rtol=1e-3)

    print("KERNEL_OK")
</pallas_src>

<mosaic_0001>
module attributes {stable_mosaic.version = 11 : i64} {
  func.func @kernel(%arg0: i32, %arg1: memref<2x32xf32, #tpu.memory_space<vmem>>, %arg2: memref<2x8x32xf32, #tpu.memory_space<vmem>>, %arg3: memref<2x8x32xf32, #tpu.memory_space<vmem>>, %arg4: memref<2x8xf32, #tpu.memory_space<vmem>>, %arg5: memref<32x32xf32, #tpu.memory_space<vmem>>, %arg6: memref<1x32xf32, #tpu.memory_space<vmem>>, %arg7: memref<1x32xf32, #tpu.memory_space<vmem>>, %arg8: memref<1xf32, #tpu.memory_space<smem>>, %arg9: memref<2x128xf32, #tpu.memory_space<vmem>>, %arg10: memref<2x128xf32, #tpu.memory_space<vmem>>) attributes {dimension_semantics = [#tpu.dimension_semantics<parallel>], iteration_bounds = array<i64: 1>, scalar_prefetch = 0 : i64, scratch_operands = 0 : i64, tpu.core_type = #tpu.core_type<tc>, window_params = [{transform_indices = @transform_0, window_bounds = array<i64: 2, 32>}, {transform_indices = @transform_1, window_bounds = array<i64: 2, 8, 32>}, {transform_indices = @transform_2, window_bounds = array<i64: 2, 8, 32>}, {transform_indices = @transform_3, window_bounds = array<i64: 2, 8>}, {pipeline_mode = #tpu.pipeline_mode<synchronous>, transform_indices = @transform_4, window_bounds = array<i64: 32, 32>}, {pipeline_mode = #tpu.pipeline_mode<synchronous>, transform_indices = @transform_5, window_bounds = array<i64: 1, 32>}, {pipeline_mode = #tpu.pipeline_mode<synchronous>, transform_indices = @transform_6, window_bounds = array<i64: 1, 32>}, {transform_indices = @transform_7, window_bounds = array<i64: 1>}, {transform_indices = @transform_8, window_bounds = array<i64: 2, 128>}, {transform_indices = @transform_9, window_bounds = array<i64: 2, 128>}]} {
    %c0 = arith.constant 0 : index
    %c0_0 = arith.constant 0 : index
    %0 = vector.load %arg1[%c0, %c0_0] : memref<2x32xf32, #tpu.memory_space<vmem>>, vector<2x32xf32>
    %c0_1 = arith.constant 0 : index
    %c0_2 = arith.constant 0 : index
    %1 = vector.load %arg5[%c0_1, %c0_2] : memref<32x32xf32, #tpu.memory_space<vmem>>, vector<32x32xf32>
    %cst = arith.constant dense<0.000000e+00> : vector<2x32xf32>
    %2 = tpu.matmul %0, %1, %cst {dimension_numbers = #tpu.dot_dimension_numbers<[1], [0], [0], [1], [0, 0, 1, 1], [], []>} : vector<2x32xf32>, vector<32x32xf32>, vector<2x32xf32> -> vector<2x32xf32>
    %c0_3 = arith.constant 0 : index
    %c0_4 = arith.constant 0 : index
    %3 = vector.load %arg6[%c0_3, %c0_4] : memref<1x32xf32, #tpu.memory_space<vmem>>, vector<1x32xf32>
    %4 = vector.broadcast %3 : vector<1x32xf32> to vector<2x32xf32>
    %5 = arith.addf %2, %4 : vector<2x32xf32>
    %c0_5 = arith.constant 0 : index
    %c0_6 = arith.constant 0 : index
    %c0_7 = arith.constant 0 : index
    %6 = vector.load %arg3[%c0_5, %c0_6, %c0_7] : memref<2x8x32xf32, #tpu.memory_space<vmem>>, vector<2x8x32xf32>
    %7 = vector.shape_cast %5 : vector<2x32xf32> to vector<2x1x32xf32>
    %8 = vector.broadcast %7 : vector<2x1x32xf32> to vector<2x8x32xf32>
    %9 = arith.addf %6, %8 : vector<2x8x32xf32>
    %10 = math.tanh %9 : vector<2x8x32xf32>
    %c0_8 = arith.constant 0 : index
    %c0_9 = arith.constant 0 : index
    %11 = vector.load %arg7[%c0_8, %c0_9] : memref<1x32xf32, #tpu.memory_space<vmem>>, vector<1x32xf32>
    %12 = vector.shape_cast %11 : vector<1x32xf32> to vector<1x1x32xf32>
    %13 = vector.broadcast %12 : vector<1x1x32xf32> to vector<2x8x32xf32>
    %14 = arith.mulf %10, %13 : vector<2x8x32xf32>
    %cst_10 = arith.constant dense<0.000000e+00> : vector<2x8xf32>
    %15 = vector.multi_reduction <add>, %14, %cst_10 [2] : vector<2x8x32xf32> to vector<2x8xf32>
    %c0_11 = arith.constant 0 : index
    %16 = memref.load %arg8[%c0_11] : memref<1xf32, #tpu.memory_space<smem>>
    %17 = vector.broadcast %16 : f32 to vector<2x8xf32>
    %18 = arith.addf %15, %17 : vector<2x8xf32>
    %cst_12 = arith.constant dense<0xFF800000> : vector<2xf32>
    %19 = vector.multi_reduction <maximumf>, %18, %cst_12 [1] : vector<2x8xf32> to vector<2xf32>
    %20 = vector.shape_cast %19 : vector<2xf32> to vector<2x1xf32>
    %21 = vector.broadcast %20 : vector<2x1xf32> to vector<2x8xf32>
    %22 = arith.subf %18, %21 : vector<2x8xf32>
    %23 = math.exp %22 : vector<2x8xf32>
    %c0_13 = arith.constant 0 : index
    %c0_14 = arith.constant 0 : index
    %24 = vector.load %arg4[%c0_13, %c0_14] : memref<2x8xf32, #tpu.memory_space<vmem>>, vector<2x8xf32>
    %25 = arith.mulf %23, %24 : vector<2x8xf32>
    %cst_15 = arith.constant dense<0.000000e+00> : vector<2xf32>
    %26 = vector.multi_reduction <add>, %25, %cst_15 [1] : vector<2x8xf32> to vector<2xf32>
    %27 = vector.shape_cast %26 : vector<2xf32> to vector<2x1xf32>
    %28 = tpu.reciprocal %27 : vector<2x1xf32> -> vector<2x1xf32>
    %29 = vector.broadcast %28 : vector<2x1xf32> to vector<2x8xf32>
    %30 = arith.mulf %25, %29 : vector<2x8xf32>
    %31 = vector.shape_cast %30 : vector<2x8xf32> to vector<2x8x1xf32>
    %c0_16 = arith.constant 0 : index
    %c0_17 = arith.constant 0 : index
    %c0_18 = arith.constant 0 : index
    %32 = vector.load %arg2[%c0_16, %c0_17, %c0_18] : memref<2x8x32xf32, #tpu.memory_space<vmem>>, vector<2x8x32xf32>
    %33 = vector.broadcast %31 : vector<2x8x1xf32> to vector<2x8x32xf32>
    %34 = arith.mulf %33, %32 : vector<2x8x32xf32>
    %cst_19 = arith.constant dense<0.000000e+00> : vector<2x32xf32>
    %35 = vector.multi_reduction <add>, %34, %cst_19 [1] : vector<2x8x32xf32> to vector<2x32xf32>
    %cst_20 = arith.constant 0.000000e+00 : f32
    %36 = vector.broadcast %cst_20 : f32 to vector<2x96xf32>
    %37 = tpu.concatenate %35, %36 in 1 : vector<2x32xf32>, vector<2x96xf32> -> vector<2x128xf32>
    %c0_21 = arith.constant 0 : index
    %c0_22 = arith.constant 0 : index
    %38 = vector.load %arg9[%c0_21, %c0_22] : memref<2x128xf32, #tpu.memory_space<vmem>>, vector<2x128xf32>
    tpu.vector_store %arg9[%c0_21, %c0_22], %37 {strides = array<i32>} : memref<2x128xf32, #tpu.memory_space<vmem>>, vector<2x128xf32>,
    %cst_23 = arith.constant 0.000000e+00 : f32
    %39 = vector.broadcast %cst_23 : f32 to vector<2x120xf32>
    %40 = tpu.concatenate %30, %39 in 1 : vector<2x8xf32>, vector<2x120xf32> -> vector<2x128xf32>
    %c0_24 = arith.constant 0 : index
    %c0_25 = arith.constant 0 : index
    %41 = vector.load %arg10[%c0_24, %c0_25] : memref<2x128xf32, #tpu.memory_space<vmem>>, vector<2x128xf32>
    tpu.vector_store %arg10[%c0_24, %c0_25], %40 {strides = array<i32>} : memref<2x128xf32, #tpu.memory_space<vmem>>, vector<2x128xf32>,
    return
  }
  func.func @transform_0(%arg0: i32) -> (i32, i32) {
    %c0_i32 = arith.constant 0 : i32
    %c0_i32_0 = arith.constant 0 : i32
    return %arg0, %c0_i32 : i32, i32
  }
  func.func @transform_1(%arg0: i32) -> (i32, i32, i32) {
    %c0_i32 = arith.constant 0 : i32
    %c0_i32_0 = arith.constant 0 : i32
    %c0_i32_1 = arith.constant 0 : i32
    return %arg0, %c0_i32, %c0_i32_0 : i32, i32, i32
  }
  func.func @transform_2(%arg0: i32) -> (i32, i32, i32) {
    %c0_i32 = arith.constant 0 : i32
    %c0_i32_0 = arith.constant 0 : i32
    %c0_i32_1 = arith.constant 0 : i32
    return %arg0, %c0_i32, %c0_i32_0 : i32, i32, i32
  }
  func.func @transform_3(%arg0: i32) -> (i32, i32) {
    %c0_i32 = arith.constant 0 : i32
    %c0_i32_0 = arith.constant 0 : i32
    return %arg0, %c0_i32 : i32, i32
  }
  func.func @transform_4(%arg0: i32) -> (i32, i32) {
    %c0_i32 = arith.constant 0 : i32
    %c0_i32_0 = arith.constant 0 : i32
    %c0_i32_1 = arith.constant 0 : i32
    return %c0_i32, %c0_i32_0 : i32, i32
  }
  func.func @transform_5(%arg0: i32) -> (i32, i32) {
    %c0_i32 = arith.constant 0 : i32
    %c0_i32_0 = arith.constant 0 : i32
    %c0_i32_1 = arith.constant 0 : i32
    return %c0_i32, %c0_i32_0 : i32, i32
  }
  func.func @transform_6(%arg0: i32) -> (i32, i32) {
    %c0_i32 = arith.constant 0 : i32
    %c0_i32_0 = arith.constant 0 : i32
    %c0_i32_1 = arith.constant 0 : i32
    return %c0_i32, %c0_i32_0 : i32, i32
  }
  func.func @transform_7(%arg0: i32) -> i32 {
    %c0_i32 = arith.constant 0 : i32
    %c0_i32_0 = arith.constant 0 : i32
    return %c0_i32 : i32
  }
  func.func @transform_8(%arg0: i32) -> (i32, i32) {
    %c0_i32 = arith.constant 0 : i32
    %c0_i32_0 = arith.constant 0 : i32
    return %arg0, %c0_i32 : i32, i32
  }
  func.func @transform_9(%arg0: i32) -> (i32, i32) {
    %c0_i32 = arith.constant 0 : i32
    %c0_i32_0 = arith.constant 0 : i32
    return %arg0, %c0_i32 : i32, i32
  }
}

</mosaic_0001>

<llo_original>
// kernel: tpu_custom_call.1
$region0: #{tpu_custom_call.1}
  #allocation0 [shape = 'u32[]', space=smem, size = 0x4, offset = 0x4, fixed_abs, tag = 'smem constant byte address 0x4 - core index']
  #allocation1 [shape = 'u32[144,128]{1,0:T(1,128)}', space=vmem, size = 0x12000, scoped, tag = 'internal scratch']
  #allocation2 [shape = 'f32[1]{0:T(128)S(6)}', space=smem, size = 0x200, scoped, tag = 'scoped memory for tpu_custom_call.1']
  %s0 = inlined_call_operand.vmem [shape: f32[2,32], index: 0, kind: input, shape index: {}]
  %s1 = inlined_call_operand.hbm [shape: f32[2,8,32], index: 1, kind: input, shape index: {}]
  %s2 = inlined_call_operand.hbm [shape: f32[2,8,32], index: 2, kind: input, shape index: {}]
  %s3 = inlined_call_operand.vmem [shape: f32[2,8], index: 3, kind: input, shape index: {}]
  %s4 = inlined_call_operand.hbm [shape: f32[32,32], index: 4, kind: input, shape index: {}]
  %s5 = inlined_call_operand.vmem [shape: f32[1,32], index: 5, kind: input, shape index: {}]
  %s6 = inlined_call_operand.vmem [shape: f32[1,32], index: 6, kind: input, shape index: {}]
  %s7 = inlined_call_operand.<no memory space> [shape: f32[1], index: 7, kind: input, shape index: {}]
  %s8 = inlined_call_operand.hbm [shape: f32[2,128], index: 8, kind: output, shape index: {0}]
  %s9 = inlined_call_operand.hbm [shape: f32[2,128], index: 9, kind: output, shape index: {1}]
  %10 = xla_tuple %s8, %s9
  %s11 = sld [smem:[#allocation0]]
  $region62: #{tpu_custom_call.1} parent=0
    _
  %s13 = ssub.s32 1, %s11
  %s14 = scalar_select 0, %s13, %s11
  %15 = sst [smem:[#allocation2]] %s7
  $region1: #{tpu_custom_call.1} parent=0
    #allocation3 [shape = 'u8[8192]{0}', space=vmem, size = 0x2000, scoped, tag = 'input window, operand 1, single buffered']
    #allocation4 [shape = 's32[1]{0}', space=sflag, size = 0x4, scoped, tag = 'scoped memory for tpu_custom_call.1']
    #allocation5 [shape = 's32[1]{0}', space=sflag, size = 0x4, scoped, tag = 'scoped memory for tpu_custom_call.1']
    #allocation6 [shape = 'u8[8192]{0}', space=vmem, size = 0x2000, scoped, tag = 'input window, operand 2, single buffered']
    #allocation7 [shape = 's32[1]{0}', space=sflag, size = 0x4, scoped, tag = 'scoped memory for tpu_custom_call.1']
    #allocation8 [shape = 'u8[16384]{0}', space=vmem, size = 0x4000, scoped, tag = 'input window, operand 4, single buffered']
    #allocation9 [shape = 'u8[1024]{0}', space=vmem, size = 0x400, scoped, tag = 'output window, operand 0, single buffered']
    #allocation10 [shape = 'u8[1024]{0}', space=vmem, size = 0x400, scoped, tag = 'output window, operand 1, single buffered']
    #allocation11 [shape = 's32[1]{0}', space=sflag, size = 0x4, scoped, tag = 'scoped memory for tpu_custom_call.1']
    %16 = vsyncpa [#allocation4], 0
    %17 = vsyncpa [#allocation7], 0
    %18 = vsyncpa [#allocation5], 0
    %19 = vsyncpa [#allocation11], 0
    // Predicated region
    $region2: #{tpu_custom_call.1} parent=1 // pred_check
      _
    $region3: #{tpu_custom_call.1} parent=1 // pred_check_branch
      %21 = sbr.rel (0) target = $region5
    $region4: #{tpu_custom_call.1} parent=1 // pred_region
      _
    $region5: #{tpu_custom_call.1} parent=1 // pred_fallthru
      _
    // Predicated region
    $region6: #{tpu_custom_call.1} parent=1 // pred_check
      _
    $region7: #{tpu_custom_call.1} parent=1 // pred_check_branch
      %23 = sbr.rel (0) target = $region9
    $region8: #{tpu_custom_call.1} parent=1 // pred_region
      %s25 = ssub.s32 256, 256
      %26 = vsyncadd [#allocation4], %s25
      %s27 = sshll.u32 [#allocation3], 4
      %s28 = int_to_ptr.vmem [resolvable:$true] %s27
      %33 = dma.hbm_to_vmem [thread:$0]  %s1, 256, %s28, [#allocation4], 128, 128, 8
    $region9: #{tpu_custom_call.1} parent=1 // pred_fallthru
      _
    // Predicated region
    $region10: #{tpu_custom_call.1} parent=1 // pred_check
      _
    $region11: #{tpu_custom_call.1} parent=1 // pred_check_branch
      %35 = sbr.rel (0) target = $region13
    $region12: #{tpu_custom_call.1} parent=1 // pred_region
      %s37 = ssub.s32 256, 256
      %38 = vsyncadd [#allocation7], %s37
      %s39 = sshll.u32 [#allocation6], 4
      %s40 = int_to_ptr.vmem [resolvable:$true] %s39
      %45 = dma.hbm_to_vmem [thread:$0]  %s2, 256, %s40, [#allocation7], 128, 128, 8
    $region13: #{tpu_custom_call.1} parent=1 // pred_fallthru
      _
    // Predicated region
    $region14: #{tpu_custom_call.1} parent=1 // pred_check
      _
    $region15: #{tpu_custom_call.1} parent=1 // pred_check_branch
      %47 = sbr.rel (0) target = $region17
    $region16: #{tpu_custom_call.1} parent=1 // pred_region
      _
    $region17: #{tpu_custom_call.1} parent=1 // pred_fallthru
      _
    // Predicated region
    $region18: #{tpu_custom_call.1} parent=1 // pred_check
      _
    $region19: #{tpu_custom_call.1} parent=1 // pred_check_branch
      %49 = sbr.rel (0) target = $region21
    $region20: #{tpu_custom_call.1} parent=1 // pred_region
      %s51 = ssub.s32 512, 512
      %52 = vsyncadd [#allocation7], %s51
      %s53 = sshll.u32 [#allocation8], 4
      %s54 = int_to_ptr.vmem [resolvable:$true] %s53
      %59 = dma.hbm_to_vmem [thread:$0]  %s4, 512, %s54, [#allocation7], 128, 128, 8
    $region21: #{tpu_custom_call.1} parent=1 // pred_fallthru
      _
    // Predicated region
    $region22: #{tpu_custom_call.1} parent=1 // pred_check
      _
    $region23: #{tpu_custom_call.1} parent=1 // pred_check_branch
      %61 = sbr.rel (0) target = $region25
    $region24: #{tpu_custom_call.1} parent=1 // pred_region
      _
    $region25: #{tpu_custom_call.1} parent=1 // pred_fallthru
      _
    // Predicated region
    $region26: #{tpu_custom_call.1} parent=1 // pred_check
      _
    $region27: #{tpu_custom_call.1} parent=1 // pred_check_branch
      %63 = sbr.rel (0) target = $region29
    $region28: #{tpu_custom_call.1} parent=1 // pred_region
      _
    $region29: #{tpu_custom_call.1} parent=1 // pred_fallthru
      _
    // Predicated region
    $region30: #{tpu_custom_call.1} parent=1 // pred_check
      _
    $region31: #{tpu_custom_call.1} parent=1 // pred_check_branch
      %65 = sbr.rel (0) target = $region33
    $region32: #{tpu_custom_call.1} parent=1 // pred_region
      _
    $region33: #{tpu_custom_call.1} parent=1 // pred_fallthru
      _
    // Predicated region
    $region34: #{tpu_custom_call.1} parent=1 // pred_check
      _
    $region35: #{tpu_custom_call.1} parent=1 // pred_check_branch
      %67 = sbr.rel (0) target = $region37
    $region36: #{tpu_custom_call.1} parent=1 // pred_region
      %68 = dma.done [#allocation4], 256
    $region37: #{tpu_custom_call.1} parent=1 // pred_fallthru
      _
    // Predicated region
    $region38: #{tpu_custom_call.1} parent=1 // pred_check
      _
    $region39: #{tpu_custom_call.1} parent=1 // pred_check_branch
      %70 = sbr.rel (0) target = $region41
    $region40: #{tpu_custom_call.1} parent=1 // pred_region
      %71 = dma.done [#allocation7], 256
    $region41: #{tpu_custom_call.1} parent=1 // pred_fallthru
      _
    // Predicated region
    $region42: #{tpu_custom_call.1} parent=1 // pred_check
      _
    $region43: #{tpu_custom_call.1} parent=1 // pred_check_branch
      %73 = sbr.rel (0) target = $region45
    $region44: #{tpu_custom_call.1} parent=1 // pred_region
      %74 = dma.done [#allocation7], 512
    $region45: #{tpu_custom_call.1} parent=1 // pred_fallthru
      _
    %v75 = vld [vmem:[%s0] sm:$0x3]
    %v76 = vld [vmem:[#allocation8] sm:$0xff]
    %v77 = vld [vmem:[#allocation8 + $0x8] sm:$0xff]
    %v78 = vld [vmem:[#allocation8 + $0x10] sm:$0xff]
    %v79 = vld [vmem:[#allocation8 + $0x18] sm:$0xff]
    %v80 = vld [vmem:[%s5] sm:$0x1]
    %v82 = vlaneseq
    %v83 = vshrl.u32 %v82, 7
    %v84 = vsub.s32 0, %v83
    %v85 = vrot.slane %v80, %v84
    %vm87 = vcmask 261120
    %v89 = vsel %vm87, %v75, 0
    %91 = vmatprep.subr.mxu0 0.0
    %92 = vmatpush1.msra.mxu0 %v76
    %93 = vmatprep.subr.mxu0 0.0
    %94 = vmatpush1.msra.mxu0 %v77
    %95 = vmatprep.subr.mxu0 0.0
    %96 = vmatpush1.msra.mxu0 %v78
    %97 = vmatprep.subr.mxu0 0.0
    %98 = vmatpush1.msra.mxu0 %v79
    %99 = vmatprep.subr.mxu0 0.0
    %100 = vmatpush1.msra.mxu0 0.0
    %101 = vmatprep.subr.mxu0 0.0
    %102 = vmatpush1.msra.mxu0 0.0
    %103 = vmatprep.subr.mxu0 0.0
    %104 = vmatpush1.msra.mxu0 0.0
    %105 = vmatprep.subr.mxu0 0.0
    %106 = vmatpush1.msra.mxu0 0.0
    %107 = vmatprep.subr.mxu0 0.0
    %108 = vmatpush1.msra.mxu0 0.0
    %109 = vmatprep.subr.mxu0 0.0
    %110 = vmatpush1.msra.mxu0 0.0
    %111 = vmatprep.subr.mxu0 0.0
    %112 = vmatpush1.msra.mxu0 0.0
    %113 = vmatprep.subr.mxu0 0.0
    %114 = vmatpush1.msra.mxu0 0.0
    %115 = vmatprep.subr.mxu0 0.0
    %116 = vmatpush1.msra.mxu0 0.0
    %117 = vmatprep.subr.mxu0 0.0
    %118 = vmatpush1.msra.mxu0 0.0
    %119 = vmatprep.subr.mxu0 0.0
    %120 = vmatpush1.msra.mxu0 0.0
    %121 = vmatprep.subr.mxu0 0.0
    %122 = vmatpush1.msra.mxu0 0.0
    %123 = vmatprep.subr.mxu0 0.0
    %124 = vmatpush1.msra.mxu0 0.0
    %125 = vmatprep.subr.mxu0 0.0
    %126 = vmatpush1.msra.mxu0 0.0
    %127 = vmatprep.subr.mxu0 0.0
    %128 = vmatpush1.msra.mxu0 0.0
    %129 = vmatprep.subr.mxu0 0.0
    %130 = vmatpush1.msra.mxu0 0.0
    %131 = vmatprep.subr.mxu0 0.0
    %132 = vmatpush1.msra.mxu0 0.0
    %133 = vmatprep.subr.mxu0 0.0
    %134 = vmatpush1.msra.mxu0 0.0
    %135 = vmatprep.subr.mxu0 0.0
    %136 = vmatpush1.msra.mxu0 0.0
    %137 = vmatprep.subr.mxu0 0.0
    %138 = vmatpush1.msra.mxu0 0.0
    %139 = vmatprep.subr.mxu0 0.0
    %140 = vmatpush1.msra.mxu0 0.0
    %141 = vmatprep.subr.mxu0 0.0
    %142 = vmatpush1.msra.mxu0 0.0
    %143 = vmatprep.subr.mxu0 0.0
    %144 = vmatpush1.msra.mxu0 0.0
    %145 = vmatprep.subr.mxu0 0.0
    %146 = vmatpush1.msra.mxu0 0.0
    %147 = vmatprep.subr.mxu0 0.0
    %148 = vmatpush1.msra.mxu0 0.0
    %149 = vmatprep.subr.mxu0 0.0
    %150 = vmatpush1.msra.mxu0 0.0
    %151 = vmatprep.subr.mxu0 0.0
    %152 = vmatpush1.msra.mxu0 0.0
    %153 = vmatprep.subr.mxu0 0.0
    %154 = vmatpush1.msra.mxu0 0.0
    %155 = vmatprep.mubr.f32.mxu0 0.0
    %156 = vmatmul.mubr.f32.gmra.mrb[0].mxu0 %v89
    %v157 = vpop.f32.mrb[0].mxu0
    %v158 = vadd.f32 %v85, %v157
    %v159 = vpop.f32.mrb[0].mxu0
    %160 = vdwg.mxu0
    %v161 = vld [vmem:[#allocation6] sm:$0xff]
    %v162 = vld [vmem:[#allocation6 + $0x8] sm:$0xff]
    %v165 = vunpack.c.l.s4 1966171168
    %v166 = vunpack.c.0.s8 %v165
    %v167 = vlaneseq
    %v168 = vshrl.u32 %v167, 7
    %v169 = vsub.s32 %v166, %v168
    %v170 = vrot.slane %v158, %v169
    %v171 = vcombine.high %v170, %v170
    %v173 = vunpack.c.l.s4 1966171168
    %v174 = vunpack.c.0.s8 %v173
    %v175 = vlaneseq
    %v176 = vshrl.u32 %v175, 7
    %v177 = vsub.s32 %v174, %v176
    %v178 = vrot.slane %v170, %v177
    %v180 = vunpack.c.l.s4 1966171168
    %v181 = vunpack.c.0.s8 %v180
    %v182 = vlaneseq
    %v183 = vshrl.u32 %v182, 7
    %v184 = vsub.s32 %v181, %v183
    %v185 = vrot.slane %v171, %v184
    %v186 = vlaneseq
    %v187 = vshrl.u32 %v186, 7
    %v188 = vsub.s32 0, %v187
    %v189 = vrot.slane %v178, %v188
    %v190 = vlaneseq
    %v191 = vshrl.u32 %v190, 7
    %v192 = vsub.s32 0, %v191
    %v193 = vrot.slane %v185, %v192
    %v196 = vadd.f32 %v161, %v189
    %v197 = vadd.f32 %v162, %v193
    %v198 = vtanh.pop %v196
    %v199 = vtanh.pop %v197
    %v200 = vld [vmem:[%s6] sm:$0x1]
    %v202 = vlaneseq
    %v203 = vshrl.u32 %v202, 7
    %v204 = vsub.s32 0, %v203
    %v205 = vrot.slane %v200, %v204
    %v207 = vmul.f32 %v198, %v205
    %v208 = vmul.f32 %v199, %v205
    %v209 = vsel %vm87, %v207, 0.0
    %210 = vadd.xlane.f32.xlu0 %v209
    %v211 = vpop.xlane.xlu0 %210
    %v212 = vsel %vm87, %v208, 0.0
    %213 = vadd.xlane.f32.xlu0 %v212
    %v214 = vpop.xlane.xlu0 %213
    %s215 = sld [smem:[#allocation2]]
    %v216 = vstv %s215
    %v217 = vadd.f32 %v211, %v216
    %v218 = vadd.f32 %v214, %v216
    %v221 = vlaneseq
    %v222 = vand.u32 %v221, 127
    %v223 = vlaneseq
    %v224 = vshrl.u32 %v223, 7
    %v225 = vsub.s32 %v222, %v224
    %v226 = vrot.slane %v217, %v225
    %v227 = vlaneseq
    %v228 = vshrl.u32 %v227, 7
    %v229 = vsub.s32 %v222, %v228
    %v230 = vrot.slane %v218, %v229
    %vm231 = vcmask 1041409
    %v232 = vsel %vm231, %v230, %v226
    %vm234 = vcmask 58368
    %v235 = vsel %vm234, %v232, -inf
    %236 = vmax.xlane.f32.xlu0 %v235
    %v237 = vpop.xlane.xlu0 %236
    %v239 = vlaneseq
    %v240 = vshrl.u32 %v239, 7
    %v241 = vsub.s32 0, %v240
    %v242 = vrot.slane %v237, %v241
    %v243 = vlaneseq
    %v244 = vshrl.u32 %v243, 7
    %v245 = vsub.s32 1, %v244
    %v246 = vrot.slane %v237, %v245
    %v249 = vsub.f32 %v217, %v242
    %v250 = vsub.f32 %v218, %v246
    %v251 = vmul.f32 %v249, 1.442695
    %v252 = vpow.pop %v251
    %v253 = vmul.f32 %v250, 1.442695
    %v254 = vpow.pop %v253
    %v255 = vld [vmem:[%s3] sm:$0x3]
    %v257 = vlaneseq
    %v258 = vshrl.u32 %v257, 7
    %v259 = vsub.s32 0, %v258
    %v260 = vrot.slane %v255, %v259
    %262 = vbcast.lane.b32.xlu0 %v260, 256
    %v263 = vpop.permute.xlu0 %262
    %v264 = vlaneseq
    %v265 = vshrl.u32 %v264, 7
    %v266 = vsub.s32 1, %v265
    %v267 = vrot.slane %v255, %v266
    %269 = vbcast.lane.b32.xlu0 %v267, 256
    %v270 = vpop.permute.xlu0 %269
    %v273 = vmul.f32 %v252, %v263
    %v274 = vmul.f32 %v254, %v270
    %277 = vset.pattern.permute.xlu0 0
    %278 = vperm.xlu0 %277, %v273
    %v279 = vpop.permute.xlu0 %278
    %280 = vset.pattern.permute.xlu0 0
    %281 = vperm.xlu0 %280, %v274
    %v282 = vpop.permute.xlu0 %281
    %v283 = vlaneseq
    %v284 = vshrl.u32 %v283, 7
    %v285 = vsub.s32 %v222, %v284
    %v286 = vrot.slane %v279, %v285
    %v287 = vlaneseq
    %v288 = vshrl.u32 %v287, 7
    %v289 = vsub.s32 %v222, %v288
    %v290 = vrot.slane %v282, %v289
    %v291 = vsel %vm231, %v290, %v286
    %v293 = vsel %vm234, %v291, 0.0
    %294 = vadd.xlane.f32.xlu0 %v293
    %v295 = vpop.xlane.xlu0 %294
    %v296 = vrcp.pop %v295
    %v298 = vlaneseq
    %v299 = vshrl.u32 %v298, 7
    %v300 = vsub.s32 0, %v299
    %v301 = vrot.slane %v296, %v300
    %v302 = vlaneseq
    %v303 = vshrl.u32 %v302, 7
    %v304 = vsub.s32 1, %v303
    %v305 = vrot.slane %v296, %v304
    %v308 = vmul.f32 %v273, %v301
    %v309 = vmul.f32 %v274, %v305
    %v310 = vld [vmem:[#allocation3] sm:$0xff]
    %v311 = vld [vmem:[#allocation3 + $0x8] sm:$0xff]
    %313 = vset.pattern.permute.xlu0 0
    %314 = vperm.xlu0 %313, %v308
    %v315 = vpop.permute.xlu0 %314
    %318 = vset.pattern.permute.xlu0 0
    %319 = vperm.xlu0 %318, %v309
    %v320 = vpop.permute.xlu0 %319
    %v322 = vmul.f32 %v315, %v310
    %v323 = vmul.f32 %v320, %v311
    %v324 = vsel %vm87, %v322, 0.0
    %v325 = vrot.slane %v324, 4
    %v326 = vadd.f32 %v324, %v325
    %v327 = vrot.slane %v326, 2
    %v328 = vadd.f32 %v326, %v327
    %v329 = vrot.slane %v328, 1
    %v330 = vadd.f32 %v328, %v329
    %v331 = vsel %vm87, %v323, 0.0
    %v332 = vrot.slane %v331, 4
    %v333 = vadd.f32 %v331, %v332
    %v334 = vrot.slane %v333, 2
    %v335 = vadd.f32 %v333, %v334
    %v336 = vrot.slane %v335, 1
    %v337 = vadd.f32 %v335, %v336
    %v340 = vsel %vm231, %v337, %v330
    %v342 = vsel %vm87, %v340, 0.0
    %343 = vst [vmem:[#allocation9] sm:$0x3] %v342
    %v344 = vlaneseq
    %v345 = vshrl.u32 %v344, 7
    %v346 = vsub.s32 %v222, %v345
    %v347 = vrot.slane %v315, %v346
    %v348 = vlaneseq
    %v349 = vshrl.u32 %v348, 7
    %v350 = vsub.s32 %v222, %v349
    %v351 = vrot.slane %v320, %v350
    %v352 = vsel %vm231, %v351, %v347
    %vm354 = vcmask 64512
    %v355 = vsel %vm354, %v352, 0.0
    %356 = vst [vmem:[#allocation10] sm:$0x3] %v355
    // Predicated region
    $region46: #{tpu_custom_call.1} parent=1 // pred_check
      _
    $region47: #{tpu_custom_call.1} parent=1 // pred_check_branch
      %358 = sbr.rel (0) target = $region49
    $region48: #{tpu_custom_call.1} parent=1 // pred_region
      %s360 = ssub.s32 32, 32
      %361 = vsyncadd [#allocation5], %s360
      %s363 = sshll.u32 [#allocation9], 4
      %s364 = int_to_ptr.vmem [resolvable:$true] %s363
      %366 = dma.vmem_to_hbm [thread:$0]  %s364, 32, %s8, [#allocation5]
    $region49: #{tpu_custom_call.1} parent=1 // pred_fallthru
      _
    // Predicated region
    $region50: #{tpu_custom_call.1} parent=1 // pred_check
      _
    $region51: #{tpu_custom_call.1} parent=1 // pred_check_branch
      %368 = sbr.rel (0) target = $region53
    $region52: #{tpu_custom_call.1} parent=1 // pred_region
      %s370 = ssub.s32 32, 32
      %371 = vsyncadd [#allocation11], %s370
      %s373 = sshll.u32 [#allocation10], 4
      %s374 = int_to_ptr.vmem [resolvable:$true] %s373
      %376 = dma.vmem_to_hbm [thread:$0]  %s374, 32, %s9, [#allocation11]
    $region53: #{tpu_custom_call.1} parent=1 // pred_fallthru
      _
    // Predicated region
    $region54: #{tpu_custom_call.1} parent=1 // pred_check
      _
    $region55: #{tpu_custom_call.1} parent=1 // pred_check_branch
      %378 = sbr.rel (0) target = $region57
    $region56: #{tpu_custom_call.1} parent=1 // pred_region
      %379 = dma.done [#allocation5], 32
    $region57: #{tpu_custom_call.1} parent=1 // pred_fallthru
      _
    // Predicated region
    $region58: #{tpu_custom_call.1} parent=1 // pred_check
      _
    $region59: #{tpu_custom_call.1} parent=1 // pred_check_branch
      %381 = sbr.rel (0) target = $region61
    $region60: #{tpu_custom_call.1} parent=1 // pred_region
      %382 = dma.done [#allocation11], 32
    $region61: #{tpu_custom_call.1} parent=1 // pred_fallthru
      _
    %383 = vsyncpa [#allocation4], 1
    %384 = vsyncpa [#allocation7], 1
    %385 = vsyncpa [#allocation5], 1
    %386 = vsyncpa [#allocation11], 1

</llo_original>
